<compile_context>
chip_gen: v5e
topology: v5e:2x2
jax: 0.10.0
libtpu: 0.0.40
codegen_flags: <defaults>
</compile_context>

<pallas_src>
import functools

import jax
import jax.numpy as jnp
import numpy as np
from jax.experimental import pallas as pl
from jax.experimental.pallas import tpu as pltpu


def _round_up(x, m):
    return ((x + m - 1) // m) * m


def _cdiv(a, b):
    return -(-a // b)


# ----------------------------------------------------------------------------
# Generation-aware sizing.
# ----------------------------------------------------------------------------
@functools.lru_cache(maxsize=1)
def _tpu_sizing():
    vmem_cap = None
    try:
        info = pltpu.get_tpu_info()
        cap = getattr(info, "vmem_capacity_bytes", None)
        if cap:
            vmem_cap = int(cap)
    except Exception:
        vmem_cap = None
    kind = ""
    try:
        kind = jax.devices()[0].device_kind.lower()
    except Exception:
        pass
    if vmem_cap is None:
        # v5e/v6e: 128 MiB VMEM per core; v7x: 64 MiB.  Unknown -> v7x-safe.
        vmem_cap = (128 << 20) if ("v5" in kind or "v6" in kind) else (64 << 20)
    # MXU is 128 wide on v5e, 256 wide on v6e/v7x: pack small-C_out outputs to
    # the MXU width (stores stay 128-lane dense either way).
    lane_target = 128 if "v5" in kind else 256
    budget = vmem_cap // 2            # working-set cap used when picking tiles
    vmem_limit = (vmem_cap * 3) // 4  # scoped VMEM limit handed to Mosaic
    return budget, vmem_limit, lane_target


# ----------------------------------------------------------------------------
# Pallas kernel:  o = epilogue( sum_k  patches_tile @ W_tile )
#   epilogue = (* scale) + shift  ->  optional (Leaky)ReLU
#   (bias and eval-mode BatchNorm are folded into scale & shift on the host)
# ----------------------------------------------------------------------------
def _conv_mm_kernel(p_ref, w_ref, shift_ref, *rest,
                    use_scale, use_act, leaky_slope, single_k):
    if use_scale:
        scale_ref = rest[0]
        rest = rest[1:]
    else:
        scale_ref = None

    def epilogue(acc):
        if use_scale:
            acc = acc * scale_ref[...] + shift_ref[...]
        else:
            acc = acc + shift_ref[...]
        if use_act:
            if leaky_slope is None:
                acc = jnp.maximum(acc, 0.0)
            else:
                acc = jnp.where(acc > 0.0, acc, leaky_slope * acc)
        return acc

    if single_k:
        # Single K step: no accumulator scratch, no acc read-modify-write
        # (saves the scarcest VLIW slot: vector stores) and no K grid axis.
        (o_ref,) = rest
        acc = jnp.dot(p_ref[...], w_ref[...],
                      preferred_element_type=jnp.float32)
        o_ref[...] = epilogue(acc).astype(o_ref.dtype)
    else:
        o_ref, acc_ref = rest
        kt = pl.program_id(2)

        @pl.when(kt == 0)
        def _():
            acc_ref[...] = jnp.zeros_like(acc_ref)

        acc_ref[...] += jnp.dot(p_ref[...], w_ref[...],
                                preferred_element_type=jnp.float32)

        @pl.when(kt == pl.num_programs(2) - 1)
        def _():
            o_ref[...] = epilogue(acc_ref[...]).astype(o_ref.dtype)


# ----------------------------------------------------------------------------
# Tiling heuristics.
# ----------------------------------------------------------------------------
def _plan_k(k2, n2, in_bytes, budget):
    """Returns (k2_padded, tk, single_k)."""
    resident_cap = min(budget // 6, 8 << 20)
    w_bytes = k2 * n2 * in_bytes
    if w_bytes <= resident_cap and k2 <= 8192:
        # Whole (packed) weight fits comfortably: keep it resident, one K step.
        return k2, k2, True
    # Tile K: pad it to a 128 multiple so a proper K-axis pipeline exists even
    # for ragged K (the old full-width fallback could exceed the VMEM limit).
    k2p = _round_up(k2, 128)
    for tk in (2048, 1024, 512, 256, 128):
        if k2p % tk == 0:
            return k2p, tk, False
    return k2p, 128, False


def _pick_tn(n2):
    if n2 <= 512:
        return n2
    for t in (512, 256, 128):
        if n2 % t == 0:
            return t
    return n2


def _pick_tm(m2, tk, tn, in_bytes, out_bytes, budget, sub, single_k):
    m2r = _round_up(max(m2, 1), sub)
    acc_row_bytes = 0 if single_k else tn * 4
    chosen = sub
    for tm in (2048, 1024, 512, 256, 128, 64, 32, 16, 8):
        if tm % sub or tm > m2r:
            continue
        need = (2 * tm * tk * in_bytes      # patches tile (double-buffered)
                + 2 * tk * tn * in_bytes    # weight tile  (double-buffered)
                + 2 * tm * tn * out_bytes   # output tile  (double-buffered)
                + tm * acc_row_bytes)       # f32 accumulator scratch
        if need <= budget:
            chosen = tm
            break
    # Keep >= 2 grid steps over M (so 2-TensorCore parts can split the work)
    # only when M is large enough that the extra ~0.35us step is negligible.
    if chosen >= m2r and m2r >= 128:
        chosen = _round_up(_cdiv(m2r, 2), sub)
    return max(chosen, sub)


# ----------------------------------------------------------------------------
# Fused matmul + epilogue pallas_call
# ----------------------------------------------------------------------------
def _fused_conv_matmul(p2, w2, shift2, scale2, *, tm, tn, tk, single_k,
                       use_act, leaky_slope, out_dtype, true_flops,
                       vmem_limit):
    m2_pad, k2 = p2.shape
    n2 = w2.shape[1]
    use_scale = scale2 is not None

    kernel = functools.partial(
        _conv_mm_kernel, use_scale=use_scale, use_act=use_act,
        leaky_slope=leaky_slope, single_k=single_k)

    if single_k:
        grid = (m2_pad // tm, n2 // tn)
        p_spec = pl.BlockSpec((tm, k2), lambda m, n: (m, 0))
        w_spec = pl.BlockSpec((k2, tn), lambda m, n: (0, n))
        v_spec = pl.BlockSpec((1, tn), lambda m, n: (0, n))
        o_spec = pl.BlockSpec((tm, tn), lambda m, n: (m, n))
        scratch = []
        dims = ("parallel", "parallel")
    else:
        grid = (m2_pad // tm, n2 // tn, k2 // tk)
        p_spec = pl.BlockSpec((tm, tk), lambda m, n, k: (m, k))
        w_spec = pl.BlockSpec((tk, tn), lambda m, n, k: (k, n))
        v_spec = pl.BlockSpec((1, tn), lambda m, n, k: (0, n))
        o_spec = pl.BlockSpec((tm, tn), lambda m, n, k: (m, n))
        scratch = [pltpu.VMEM((tm, tn), jnp.float32)]
        dims = ("parallel", "parallel", "arbitrary")

    in_specs = [p_spec, w_spec, v_spec]
    operands = [p2, w2, shift2]
    if use_scale:
        in_specs.append(v_spec)
        operands.append(scale2)

    in_bytes = jnp.dtype(p2.dtype).itemsize
    out_bytes = jnp.dtype(out_dtype).itemsize
    bytes_accessed = (p2.size * in_bytes + w2.size * in_bytes
                      + shift2.size * shift2.dtype.itemsize
                      + (scale2.size * scale2.dtype.itemsize if use_scale else 0)
                      + m2_pad * n2 * out_bytes)

    return pl.pallas_call(
        kernel,
        out_shape=jax.ShapeDtypeStruct((m2_pad, n2), out_dtype),
        grid_spec=pltpu.PrefetchScalarGridSpec(
            num_scalar_prefetch=0,
            grid=grid,
            in_specs=in_specs,
            out_specs=o_spec,
            scratch_shapes=scratch,
        ),
        compiler_params=pltpu.CompilerParams(
            dimension_semantics=dims,
            vmem_limit_bytes=int(vmem_limit),
        ),
        cost_estimate=pl.CostEstimate(
            flops=int(true_flops), transcendentals=0,
            bytes_accessed=int(bytes_accessed)),
    )(*operands)


# ----------------------------------------------------------------------------
# Channels-last im2col glue (no NCHW transpose)
# ----------------------------------------------------------------------------
def _im2col_nhwc(x, kh, kw, sh, sw, Wo, Ho):
    """x: (B, W, H, C) -> patches (B*Wo*Ho, kh*kw*C), K ordered as (i, j, c)."""
    B, W, H, C = x.shape
    if kh == 1 and kw == 1 and sh == 1 and sw == 1:
        return x.reshape(B * W * H, C)          # 1x1 stride-1: pure reshape
    # TODO(synk): fuse the im2col into the kernel (taps as a K/reduction grid
    # axis, or manual strided DMA from pl.ANY x) to remove the kh*kw x HBM
    # amplification of this XLA-materialized patch matrix.
    taps = []
    for i in range(kh):
        for j in range(kw):
            taps.append(x[:, j:j + sw * Wo:sw, i:i + sh * Ho:sh, :])
    patches = jnp.concatenate(taps, axis=-1)    # (B, Wo, Ho, kh*kw*C)
    return patches.reshape(B * Wo * Ho, kh * kw * C)


# ----------------------------------------------------------------------------
# Module-equivalent wrapper
# ----------------------------------------------------------------------------
class Conv2dPallas:
    """Pallas equivalent of the PyTorch `Conv2d` module ("FC implement")."""

    def __init__(self, in_channels, out_channels, kernel_size, stride=None,
                 bn=False, activation_fn=True, leaky_relu=True,
                 compute_dtype=jnp.bfloat16, key=None):
        # compute_dtype: MXU operand dtype (accumulation is always f32).
        if stride is None:
            stride = [1, 1]
        if isinstance(kernel_size, int):
            kernel_size = (kernel_size, kernel_size)
        if isinstance(stride, int):
            stride = (stride, stride)
        self.in_channels = in_channels
        self.out_channels = out_channels
        self.kh, self.kw = int(kernel_size[0]), int(kernel_size[1])
        self.sh, self.sw = int(stride[0]), int(stride[1])
        self.bn = bn
        self.activation_fn = activation_fn
        self.leaky_slope = 0.1 if leaky_relu else None   # nn.LeakyReLU(0.1)
        self.compute_dtype = compute_dtype

        key = jax.random.PRNGKey(0) if key is None else key
        kw_, kb_ = jax.random.split(key)
        fan_in = in_channels * self.kh * self.kw
        bound = 1.0 / (fan_in ** 0.5)
        # conv weight (C_out, C_in, kh, kw), bias (C_out,) (uniform like torch)
        self.weight = jax.random.uniform(
            kw_, (out_channels, in_channels, self.kh, self.kw),
            minval=-bound, maxval=bound, dtype=jnp.float32)
        self.bias = jax.random.uniform(
            kb_, (out_channels,), minval=-bound, maxval=bound,
            dtype=jnp.float32)

        # BatchNorm (eval-mode) parameters: gamma=1, beta=0, mean=0, var=1.
        # TODO(synk): training-mode BatchNorm (batch statistics + running-stat
        # updates) is stateful and not reproduced here.
        self.bn_gamma = jnp.ones((out_channels,), jnp.float32)
        self.bn_beta = jnp.zeros((out_channels,), jnp.float32)
        self.bn_mean = jnp.zeros((out_channels,), jnp.float32)
        self.bn_var = jnp.ones((out_channels,), jnp.float32)
        self.bn_eps = 1e-5

    def __call__(self, x):
        # x: (B, W, H, C_in); torch does permute(0,3,2,1) -> NCHW, conv, then
        # permute(0,3,2,1) back -> (B, Wo, Ho, C_out).
        B, W, H, C = x.shape
        kh, kw, sh, sw = self.kh, self.kw, self.sh, self.sw
        Ho = (H - kh) // sh + 1
        Wo = (W - kw) // sw + 1
        N = self.out_channels
        M = B * Wo * Ho
        K = C * kh * kw

        cdt = self.compute_dtype
        in_bytes = jnp.dtype(cdt).itemsize
        out_dtype = x.dtype
        out_bytes = jnp.dtype(out_dtype).itemsize
        sub = {1: 32, 2: 16, 4: 8}.get(in_bytes, 8)   # native sublane packing

        budget, vmem_limit, lane_target = _tpu_sizing()

        # Cast to the compute dtype BEFORE im2col so the amplified patch
        # matrix is written/read at compute-dtype width (and no later recast).
        x_c = x if x.dtype == cdt else x.astype(cdt)
        patches = _im2col_nhwc(x_c, kh, kw, sh, sw, Wo, Ho)      # (M, K)
        # weight flattened in the same (i, j, c) K order as the patches
        w_mat = jnp.transpose(self.weight, (2, 3, 1, 0)).reshape(K, N)

        # Fold bias (+ eval-mode BatchNorm) into a single per-channel affine.
        if self.bn:
            inv_std = 1.0 / jnp.sqrt(self.bn_var + self.bn_eps)
            scale = (self.bn_gamma * inv_std).astype(jnp.float32)
            shift = ((self.bias - self.bn_mean) * scale
                     + self.bn_beta).astype(jnp.float32)
        else:
            scale = None
            shift = self.bias.astype(jnp.float32)

        # Lane-dense output packing: for small C_out pack G logical output rows
        # into one kernel row via a block-diagonal weight so the output tile is
        # MXU/lane dense (256 on v6e/v7x, 128 on v5e).
        G = 1
        if N < 128 and 128 % N == 0:
            for g in (lane_target // N, 128 // N):
                if g > 1 and (g * K) * (g * N) * in_bytes <= (4 << 20):
                    G = g
                    break

        K2, N2 = G * K, G * N
        if G > 1:
            w2 = jnp.kron(jnp.eye(G, dtype=w_mat.dtype), w_mat)     # (K2, N2)
            shift2 = jnp.tile(shift.reshape(1, N), (1, G))          # (1, N2)
            scale2 = (None if scale is None
                      else jnp.tile(scale.reshape(1, N), (1, G)))
        else:
            w2 = w_mat
            shift2 = shift.reshape(1, N)
            scale2 = None if scale is None else scale.reshape(1, N)
        w2 = w2.astype(cdt)

        # Tiling plan.
        K2p, tk, single_k = _plan_k(K2, N2, in_bytes, budget)
        tn = _pick_tn(N2)
        M2 = _cdiv(M, G)
        tm = _pick_tm(M2, tk, tn, in_bytes, out_bytes, budget, sub, single_k)
        M2_pad = _round_up(max(M2, 1), tm)
        M_pad = M2_pad * G

        if M_pad != M:
            patches = jnp.pad(patches, ((0, M_pad - M), (0, 0)))
        p2 = patches.reshape(M2_pad, K2)
        if K2p != K2:   # ragged large K: zero-pad to a 128 multiple
            p2 = jnp.pad(p2, ((0, 0), (0, K2p - K2)))
            w2 = jnp.pad(w2, ((0, K2p - K2), (0, 0)))

        out2 = _fused_conv_matmul(
            p2, w2, shift2, scale2, tm=tm, tn=tn, tk=tk, single_k=single_k,
            use_act=self.activation_fn, leaky_slope=self.leaky_slope,
            out_dtype=out_dtype, true_flops=2 * M * K * N,
            vmem_limit=vmem_limit)                               # (M2_pad, N2)

        out = out2.reshape(M_pad, N)
        if M_pad != M:
            out = out[:M]
        # Row order is already (B, Wo, Ho): this IS the module's output layout.
        return out.reshape(B, Wo, Ho, N)


# ----------------------------------------------------------------------------
# Pure-JAX reference (mirrors the torch module exactly) for correctness checks
# ----------------------------------------------------------------------------
def _reference(mod, x):
    xt = jnp.transpose(x, (0, 3, 2, 1))                       # (B, C, H, W)
    out = jax.lax.conv_general_dilated(
        xt, mod.weight, window_strides=(mod.sh, mod.sw), padding="VALID",
        dimension_numbers=("NCHW", "OIHW", "NCHW"),
        precision=jax.lax.Precision.HIGHEST)
    out = out + mod.bias.reshape(1, -1, 1, 1)
    if mod.bn:
        inv = 1.0 / jnp.sqrt(mod.bn_var + mod.bn_eps)
        out = ((out - mod.bn_mean.reshape(1, -1, 1, 1))
               * (mod.bn_gamma * inv).reshape(1, -1, 1, 1)
               + mod.bn_beta.reshape(1, -1, 1, 1))
    if mod.activation_fn:
        if mod.leaky_slope is None:
            out = jnp.maximum(out, 0.0)
        else:
            out = jnp.where(out > 0.0, out, mod.leaky_slope * out)
    return jnp.transpose(out, (0, 3, 2, 1))                   # (B, Wo, Ho, N)


if __name__ == "__main__":
    key = jax.random.PRNGKey(0)
    kx, kx2, kp1, kp2, kp3 = jax.random.split(key, 5)

    B, W, H, C_in, C_out = 2, 16, 16, 4, 8
    x = jax.random.normal(kx, (B, W, H, C_in), dtype=jnp.float32)

    # 1x1 conv, no BN, LeakyReLU(0.1) — pointwise fast path (no im2col), fp32.
    conv1 = Conv2dPallas(C_in, C_out, kernel_size=1, stride=[1, 1],
                         bn=False, activation_fn=True, leaky_relu=True,
                         compute_dtype=jnp.float32, key=kp1)
    y1 = conv1(x)
    jax.block_until_ready(y1)
    assert y1.shape == (B, W, H, C_out), y1.shape
    np.testing.assert_allclose(np.asarray(y1), np.asarray(_reference(conv1, x)),
                               atol=3e-2, rtol=3e-2)

    # 3x3 / stride-2 conv with BN + LeakyReLU — channels-last im2col path,
    # folded-BN epilogue, small-C_out lane packing, bf16 compute.
    conv2 = Conv2dPallas(C_in, C_out, kernel_size=3, stride=[2, 2],
                         bn=True, activation_fn=True, leaky_relu=True,
                         key=kp2)
    y2 = conv2(x)
    jax.block_until_ready(y2)
    Wo = (W - 3) // 2 + 1
    Ho = (H - 3) // 2 + 1
    assert y2.shape == (B, Wo, Ho, C_out), y2.shape
    np.testing.assert_allclose(np.asarray(y2), np.asarray(_reference(conv2, x)),
                               atol=5e-2, rtol=5e-2)

    # Wide 3x3 conv — exercises the K-tiled accumulator path and N tiling.
    C_in3, C_out3 = 512, 1024
    x3 = jax.random.normal(kx2, (B, W, H, C_in3), dtype=jnp.float32)
    conv3 = Conv2dPallas(C_in3, C_out3, kernel_size=3, stride=[1, 1],
                         bn=False, activation_fn=True, leaky_relu=False,
                         key=kp3)
    y3 = conv3(x3)
    jax.block_until_ready(y3)
    Wo3, Ho3 = W - 2, H - 2
    assert y3.shape == (B, Wo3, Ho3, C_out3), y3.shape
    np.testing.assert_allclose(np.asarray(y3), np.asarray(_reference(conv3, x3)),
                               atol=5e-2, rtol=5e-2)

    print("KERNEL_OK")
</pallas_src>

<mosaic_0001>
module attributes {stable_mosaic.version = 11 : i64} {
  func.func @_conv_mm_kernel(%arg0: i32, %arg1: i32, %arg2: memref<16x128xf32, #tpu.memory_space<vmem>>, %arg3: memref<128x256xf32, #tpu.memory_space<vmem>>, %arg4: memref<1x256xf32, #tpu.memory_space<vmem>>, %arg5: memref<16x256xf32, #tpu.memory_space<vmem>>) attributes {dimension_semantics = [#tpu.dimension_semantics<parallel>, #tpu.dimension_semantics<parallel>], iteration_bounds = array<i64: 1, 1>, scalar_prefetch = 0 : i64, scratch_operands = 0 : i64, tpu.core_type = #tpu.core_type<tc>, window_params = [{transform_indices = @transform_0, window_bounds = array<i64: 16, 128>}, {transform_indices = @transform_1, window_bounds = array<i64: 128, 256>}, {transform_indices = @transform_2, window_bounds = array<i64: 1, 256>}, {transform_indices = @transform_3, window_bounds = array<i64: 16, 256>}]} {
    %c0 = arith.constant 0 : index
    %c0_0 = arith.constant 0 : index
    %0 = vector.load %arg2[%c0, %c0_0] : memref<16x128xf32, #tpu.memory_space<vmem>>, vector<16x128xf32>
    %c0_1 = arith.constant 0 : index
    %c0_2 = arith.constant 0 : index
    %1 = vector.load %arg3[%c0_1, %c0_2] : memref<128x256xf32, #tpu.memory_space<vmem>>, vector<128x256xf32>
    %cst = arith.constant dense<0.000000e+00> : vector<16x256xf32>
    %2 = tpu.matmul %0, %1, %cst {dimension_numbers = #tpu.dot_dimension_numbers<[1], [0], [0], [1], [0, 0, 1, 1], [], []>} : vector<16x128xf32>, vector<128x256xf32>, vector<16x256xf32> -> vector<16x256xf32>
    %c0_3 = arith.constant 0 : index
    %c0_4 = arith.constant 0 : index
    %3 = vector.load %arg4[%c0_3, %c0_4] : memref<1x256xf32, #tpu.memory_space<vmem>>, vector<1x256xf32>
    %4 = vector.broadcast %3 : vector<1x256xf32> to vector<16x256xf32>
    %5 = arith.addf %2, %4 : vector<16x256xf32>
    %cst_5 = arith.constant 0.000000e+00 : f32
    %6 = vector.broadcast %cst_5 : f32 to vector<16x256xf32>
    %7 = arith.cmpf ogt, %5, %6 : vector<16x256xf32>
    %cst_6 = arith.constant 1.000000e-01 : f32
    %8 = vector.broadcast %cst_6 : f32 to vector<16x256xf32>
    %9 = arith.mulf %8, %5 : vector<16x256xf32>
    %10 = arith.select %7, %5, %9 : vector<16x256xi1>, vector<16x256xf32>
    %c0_7 = arith.constant 0 : index
    %c0_8 = arith.constant 0 : index
    %11 = vector.load %arg5[%c0_7, %c0_8] : memref<16x256xf32, #tpu.memory_space<vmem>>, vector<16x256xf32>
    tpu.vector_store %arg5[%c0_7, %c0_8], %10 {strides = array<i32>} : memref<16x256xf32, #tpu.memory_space<vmem>>, vector<16x256xf32>,
    return
  }
  func.func @transform_0(%arg0: i32, %arg1: i32) -> (i32, i32) {
    %c0_i32 = arith.constant 0 : i32
    %c0_i32_0 = arith.constant 0 : i32
    return %arg0, %c0_i32 : i32, i32
  }
  func.func @transform_1(%arg0: i32, %arg1: i32) -> (i32, i32) {
    %c0_i32 = arith.constant 0 : i32
    %c0_i32_0 = arith.constant 0 : i32
    return %c0_i32, %arg1 : i32, i32
  }
  func.func @transform_2(%arg0: i32, %arg1: i32) -> (i32, i32) {
    %c0_i32 = arith.constant 0 : i32
    %c0_i32_0 = arith.constant 0 : i32
    return %c0_i32, %arg1 : i32, i32
  }
  func.func @transform_3(%arg0: i32, %arg1: i32) -> (i32, i32) {
    %c0_i32 = arith.constant 0 : i32
    return %arg0, %arg1 : i32, i32
  }
}

</mosaic_0001>

<llo_original>
// kernel: tpu_custom_call.1
$region0: #{tpu_custom_call.1}
  #allocation0 [shape = 'u32[]', space=smem, size = 0x4, offset = 0x4, fixed_abs, tag = 'smem constant byte address 0x4 - core index']
  #allocation1 [shape = 'u32[72,128]{1,0:T(1,128)}', space=vmem, size = 0x9000, scoped, tag = 'internal scratch']
  %s0 = inlined_call_operand.hbm [shape: f32[16,128], index: 0, kind: input, shape index: {}]
  %s1 = inlined_call_operand.hbm [shape: f32[128,256], index: 1, kind: input, shape index: {}]
  %s2 = inlined_call_operand.hbm [shape: f32[1,256], index: 2, kind: input, shape index: {}]
  %s3 = inlined_call_operand.hbm [shape: f32[16,256], index: 3, kind: output, shape index: {}]
  %s4 = sld [smem:[#allocation0]]
  $region34: #{tpu_custom_call.1} parent=0
    _
  %s6 = ssub.s32 1, %s4
  %s7 = scalar_select 0, %s6, %s4
  $region1: #{tpu_custom_call.1} parent=0
    #allocation2 [shape = 'u8[8192]{0}', space=vmem, size = 0x2000, scoped, tag = 'input window, operand 0, single buffered']
    #allocation3 [shape = 's32[1]{0}', space=sflag, size = 0x4, scoped, tag = 'scoped memory for tpu_custom_call.1']
    #allocation4 [shape = 's32[1]{0}', space=sflag, size = 0x4, scoped, tag = 'scoped memory for tpu_custom_call.1']
    #allocation5 [shape = 'u8[131072]{0}', space=vmem, size = 0x20000, scoped, tag = 'input window, operand 1, single buffered']
    #allocation6 [shape = 's32[1]{0}', space=sflag, size = 0x4, scoped, tag = 'scoped memory for tpu_custom_call.1']
    #allocation7 [shape = 'u8[1024]{0}', space=vmem, size = 0x400, scoped, tag = 'input window, operand 2, single buffered']
    #allocation8 [shape = 'u8[16384]{0}', space=vmem, size = 0x4000, scoped, tag = 'output window, operand 0, single buffered']
    %8 = vsyncpa [#allocation3], 0
    %9 = vsyncpa [#allocation6], 0
    %10 = vsyncpa [#allocation4], 0
    // Predicated region
    $region2: #{tpu_custom_call.1} parent=1 // pred_check
      _
    $region3: #{tpu_custom_call.1} parent=1 // pred_check_branch
      %12 = sbr.rel (0) target = $region5
    $region4: #{tpu_custom_call.1} parent=1 // pred_region
      %14 = vsyncadd [#allocation3], 0
      %s15 = sshll.u32 %s0, 4
      %s16 = int_to_ptr.hbm [resolvable:$true] %s15
      %s17 = sshll.u32 [#allocation2], 4
      %s18 = int_to_ptr.vmem [resolvable:$true] %s17
      %23 = dma.hbm_to_vmem [thread:$0]  %s16, 256, %s18, [#allocation3], 128, 128, 8
    $region5: #{tpu_custom_call.1} parent=1 // pred_fallthru
      _
    // Predicated region
    $region6: #{tpu_custom_call.1} parent=1 // pred_check
      _
    $region7: #{tpu_custom_call.1} parent=1 // pred_check_branch
      %25 = sbr.rel (0) target = $region9
    $region8: #{tpu_custom_call.1} parent=1 // pred_region
      %27 = vsyncadd [#allocation6], 0
      %s28 = sshll.u32 %s1, 4
      %s29 = int_to_ptr.hbm [resolvable:$true] %s28
      %s30 = sshll.u32 [#allocation5], 4
      %s31 = int_to_ptr.vmem [resolvable:$true] %s30
      %36 = dma.hbm_to_vmem [thread:$0]  %s29, 4096, %s31, [#allocation6], 256, 256, 16
    $region9: #{tpu_custom_call.1} parent=1 // pred_fallthru
      _
    // Predicated region
    $region10: #{tpu_custom_call.1} parent=1 // pred_check
      _
    $region11: #{tpu_custom_call.1} parent=1 // pred_check_branch
      %38 = sbr.rel (0) target = $region13
    $region12: #{tpu_custom_call.1} parent=1 // pred_region
      %40 = vsyncadd [#allocation6], 0
      %s42 = sshll.u32 %s2, 4
      %s43 = int_to_ptr.hbm [resolvable:$true] %s42
      %s44 = sshll.u32 [#allocation7], 4
      %s45 = int_to_ptr.vmem [resolvable:$true] %s44
      %47 = dma.hbm_to_vmem [thread:$0]  %s43, 32, %s45, [#allocation6]
    $region13: #{tpu_custom_call.1} parent=1 // pred_fallthru
      _
    // Predicated region
    $region14: #{tpu_custom_call.1} parent=1 // pred_check
      _
    $region15: #{tpu_custom_call.1} parent=1 // pred_check_branch
      %49 = sbr.rel (0) target = $region17
    $region16: #{tpu_custom_call.1} parent=1 // pred_region
      %51 = dma.done [#allocation3], 256
    $region17: #{tpu_custom_call.1} parent=1 // pred_fallthru
      _
    // Predicated region
    $region18: #{tpu_custom_call.1} parent=1 // pred_check
      _
    $region19: #{tpu_custom_call.1} parent=1 // pred_check_branch
      %53 = sbr.rel (0) target = $region21
    $region20: #{tpu_custom_call.1} parent=1 // pred_region
      %55 = dma.done [#allocation6], 4096
    $region21: #{tpu_custom_call.1} parent=1 // pred_fallthru
      _
    // Predicated region
    $region22: #{tpu_custom_call.1} parent=1 // pred_check
      _
    $region23: #{tpu_custom_call.1} parent=1 // pred_check_branch
      %57 = sbr.rel (0) target = $region25
    $region24: #{tpu_custom_call.1} parent=1 // pred_region
      %59 = dma.done [#allocation6], 32
    $region25: #{tpu_custom_call.1} parent=1 // pred_fallthru
      _
    %v60 = vld [vmem:[#allocation2] sm:$0xff]
    %v61 = vld [vmem:[#allocation2 + $0x8] sm:$0xff]
    %v62 = vld [vmem:[#allocation5] sm:$0xff]
    %v63 = vld [vmem:[#allocation5 + $0x8] sm:$0xff]
    %v64 = vld [vmem:[#allocation5 + $0x10] sm:$0xff]
    %v65 = vld [vmem:[#allocation5 + $0x18] sm:$0xff]
    %v66 = vld [vmem:[#allocation5 + $0x20] sm:$0xff]
    %v67 = vld [vmem:[#allocation5 + $0x28] sm:$0xff]
    %v68 = vld [vmem:[#allocation5 + $0x30] sm:$0xff]
    %v69 = vld [vmem:[#allocation5 + $0x38] sm:$0xff]
    %v70 = vld [vmem:[#allocation5 + $0x40] sm:$0xff]
    %v71 = vld [vmem:[#allocation5 + $0x48] sm:$0xff]
    %v72 = vld [vmem:[#allocation5 + $0x50] sm:$0xff]
    %v73 = vld [vmem:[#allocation5 + $0x58] sm:$0xff]
    %v74 = vld [vmem:[#allocation5 + $0x60] sm:$0xff]
    %v75 = vld [vmem:[#allocation5 + $0x68] sm:$0xff]
    %v76 = vld [vmem:[#allocation5 + $0x70] sm:$0xff]
    %v77 = vld [vmem:[#allocation5 + $0x78] sm:$0xff]
    %v78 = vld [vmem:[#allocation5 + $0x80] sm:$0xff]
    %v79 = vld [vmem:[#allocation5 + $0x88] sm:$0xff]
    %v80 = vld [vmem:[#allocation5 + $0x90] sm:$0xff]
    %v81 = vld [vmem:[#allocation5 + $0x98] sm:$0xff]
    %v82 = vld [vmem:[#allocation5 + $0xa0] sm:$0xff]
    %v83 = vld [vmem:[#allocation5 + $0xa8] sm:$0xff]
    %v84 = vld [vmem:[#allocation5 + $0xb0] sm:$0xff]
    %v85 = vld [vmem:[#allocation5 + $0xb8] sm:$0xff]
    %v86 = vld [vmem:[#allocation5 + $0xc0] sm:$0xff]
    %v87 = vld [vmem:[#allocation5 + $0xc8] sm:$0xff]
    %v88 = vld [vmem:[#allocation5 + $0xd0] sm:$0xff]
    %v89 = vld [vmem:[#allocation5 + $0xd8] sm:$0xff]
    %v90 = vld [vmem:[#allocation5 + $0xe0] sm:$0xff]
    %v91 = vld [vmem:[#allocation5 + $0xe8] sm:$0xff]
    %v92 = vld [vmem:[#allocation5 + $0xf0] sm:$0xff]
    %v93 = vld [vmem:[#allocation5 + $0xf8] sm:$0xff]
    %v94 = vld [vmem:[#allocation7] sm:$0x3]
    %v96 = vperm.slane %v94, 0
    %v97 = vperm.slane %v94, 1
    %100 = vmatpush.msra.mxu0 %v92
    %101 = vmatpush.msra.mxu0 %v90
    %102 = vmatpush.msra.mxu0 %v88
    %103 = vmatpush.msra.mxu0 %v86
    %104 = vmatpush.msra.mxu0 %v84
    %105 = vmatpush.msra.mxu0 %v82
    %106 = vmatpush.msra.mxu0 %v80
    %107 = vmatpush.msra.mxu0 %v78
    %108 = vmatpush.msra.mxu0 %v76
    %109 = vmatpush.msra.mxu0 %v74
    %110 = vmatpush.msra.mxu0 %v72
    %111 = vmatpush.msra.mxu0 %v70
    %112 = vmatpush.msra.mxu0 %v68
    %113 = vmatpush.msra.mxu0 %v66
    %114 = vmatpush.msra.mxu0 %v64
    %115 = vmatpush.msra.mxu0 %v62
    %116 = vmatmul.f32.gmra.mxu0 %v60
    %v117 = vpop.f32.mrf.mxu0
    %v118 = vadd.f32 %v96, %v117
    %119 = vmatmul.f32.gmra.mxu0 %v61
    %v120 = vpop.f32.mrf.mxu0
    %v121 = vadd.f32 %v96, %v120
    %122 = vdwg.mxu0
    %123 = vmatpush.msra.mxu0 %v93
    %124 = vmatpush.msra.mxu0 %v91
    %125 = vmatpush.msra.mxu0 %v89
    %126 = vmatpush.msra.mxu0 %v87
    %127 = vmatpush.msra.mxu0 %v85
    %128 = vmatpush.msra.mxu0 %v83
    %129 = vmatpush.msra.mxu0 %v81
    %130 = vmatpush.msra.mxu0 %v79
    %131 = vmatpush.msra.mxu0 %v77
    %132 = vmatpush.msra.mxu0 %v75
    %133 = vmatpush.msra.mxu0 %v73
    %134 = vmatpush.msra.mxu0 %v71
    %135 = vmatpush.msra.mxu0 %v69
    %136 = vmatpush.msra.mxu0 %v67
    %137 = vmatpush.msra.mxu0 %v65
    %138 = vmatpush.msra.mxu0 %v63
    %139 = vmatmul.f32.gmra.mxu0 %v60
    %v140 = vpop.f32.mrf.mxu0
    %v141 = vadd.f32 %v97, %v140
    %142 = vmatmul.f32.gmra.mxu0 %v61
    %v143 = vpop.f32.mrf.mxu0
    %v144 = vadd.f32 %v97, %v143
    %145 = vdwg.mxu0
    %vm146 = vcmp.gt.f32.partialorder %v118, 0.0
    %vm147 = vcmp.gt.f32.partialorder %v141, 0.0
    %vm148 = vcmp.gt.f32.partialorder %v121, 0.0
    %vm149 = vcmp.gt.f32.partialorder %v144, 0.0
    %v150 = vmul.f32 %v118, 0.1
    %v151 = vmul.f32 %v141, 0.1
    %v152 = vmul.f32 %v121, 0.1
    %v153 = vmul.f32 %v144, 0.1
    %v154 = vsel %vm146, %v118, %v150
    %v155 = vsel %vm147, %v141, %v151
    %v156 = vsel %vm148, %v121, %v152
    %v157 = vsel %vm149, %v144, %v153
    %158 = vst [vmem:[#allocation8] sm:$0xff] %v154
    %159 = vst [vmem:[#allocation8 + $0x8] sm:$0xff] %v155
    %160 = vst [vmem:[#allocation8 + $0x10] sm:$0xff] %v156
    %161 = vst [vmem:[#allocation8 + $0x18] sm:$0xff] %v157
    // Predicated region
    $region26: #{tpu_custom_call.1} parent=1 // pred_check
      _
    $region27: #{tpu_custom_call.1} parent=1 // pred_check_branch
      %163 = sbr.rel (0) target = $region29
    $region28: #{tpu_custom_call.1} parent=1 // pred_region
      %165 = vsyncadd [#allocation4], 0
      %s166 = sshll.u32 [#allocation8], 4
      %s167 = int_to_ptr.vmem [resolvable:$true] %s166
      %s168 = sshll.u32 %s3, 4
      %s169 = int_to_ptr.hbm [resolvable:$true] %s168
      %174 = dma.vmem_to_hbm [thread:$0]  %s167, 512, %s169, [#allocation4], 256, 256, 16
    $region29: #{tpu_custom_call.1} parent=1 // pred_fallthru
      _
    // Predicated region
    $region30: #{tpu_custom_call.1} parent=1 // pred_check
      _
    $region31: #{tpu_custom_call.1} parent=1 // pred_check_branch
      %176 = sbr.rel (0) target = $region33
    $region32: #{tpu_custom_call.1} parent=1 // pred_region
      %178 = dma.done [#allocation4], 512
    $region33: #{tpu_custom_call.1} parent=1 // pred_fallthru
      _
    %179 = vsyncpa [#allocation3], 1
    %180 = vsyncpa [#allocation6], 1
    %181 = vsyncpa [#allocation4], 1

</llo_original>
